<compile_context>
chip_gen: v7x
topology: tpu7x:2x2x1
jax: 0.10.0
libtpu: 0.0.40
codegen_flags: <defaults>
</compile_context>

<pallas_src>
import functools
import math

import jax
import jax.numpy as jnp
from jax.experimental import pallas as pl
from jax.experimental.pallas import tpu as pltpu


# ------------------------- DCT filter construction (init-time buffer) -------------------------

def _dct_basis_1d(size, freq):
    """build_filter(pos, freq, POS) for all pos at once."""
    pos = jnp.arange(size, dtype=jnp.float32)
    b = jnp.cos(math.pi * float(freq) * (pos + 0.5) / size) / math.sqrt(size)
    if freq != 0:
        b = b * math.sqrt(2.0)
    return b


def get_dct_filter(tile_x, tile_y, tile_z, mapper_x, mapper_y, mapper_z, channel,
                   dtype=jnp.float32):
    """Replicates MultiSpectralDCTLayer.get_dct_filter -> (C, X, Y, Z)."""
    assert len(mapper_x) == len(mapper_y) == len(mapper_z)
    assert channel % len(mapper_x) == 0
    c_part = channel // len(mapper_x)
    blocks = []
    for u_x, v_y, w_z in zip(mapper_x, mapper_y, mapper_z):
        fx = _dct_basis_1d(tile_x, u_x)
        fy = _dct_basis_1d(tile_y, v_y)
        fz = _dct_basis_1d(tile_z, w_z)
        f = fx[:, None, None] * fy[None, :, None] * fz[None, None, :]   # (X, Y, Z)
        blocks.append(jnp.broadcast_to(f[None], (c_part, tile_x, tile_y, tile_z)))
    return jnp.concatenate(blocks, axis=0).astype(dtype)


# ------------------------------------ Pallas kernels ------------------------------------

def _dct_pool_full_s_kernel(x_ref, w_ref, o_ref):
    """Common path: full flattened-spatial extent per step.

    x_ref: (bn, c_tile, S)        -- streamed per grid step
    w_ref: (nc, c_tile, S)        -- full weight, VMEM-resident (constant index map)
    o_ref: (bn, 1, c_tile) f32    -- one full write per grid step
    """
    cj = pl.program_id(1)
    wt = w_ref[cj].astype(jnp.float32)                       # (c_tile, S) slab of resident weight
    prod = x_ref[...].astype(jnp.float32) * wt[None]         # VPU multiply, f32 accumulate
    o_ref[...] = jnp.sum(prod, axis=-1)[:, None, :]          # single reduce + store per tile


def _dct_pool_tiled_kernel(s_total, ts, x_ref, w_ref, o_ref, acc_ref):
    """Fallback path for very large S: tiled reduction along S (innermost axis).

    x_ref: (bn, c_tile, ts)    w_ref: (c_tile, ts)
    o_ref: (bn, 1, c_tile) f32
    acc_ref: (bn, c_tile, 128) f32 lane-wide partial-sum scratch (VPU adds only).
    """
    k = pl.program_id(2)

    @pl.when(k == 0)
    def _():
        acc_ref[...] = jnp.zeros_like(acc_ref)

    prod = x_ref[...].astype(jnp.float32) * w_ref[...].astype(jnp.float32)[None]
    # Mask the tail tile: the block may overhang S and OOB x values are undefined.
    lane = jax.lax.broadcasted_iota(jnp.int32, prod.shape, prod.ndim - 1)
    prod = jnp.where(k * ts + lane < s_total, prod, 0.0)

    # 128-lane partial sums: plain vector adds per step, no cross-lane work yet.
    partial = acc_ref[...]
    for off in range(0, ts, 128):
        partial = partial + prod[:, :, off:off + 128]
    acc_ref[...] = partial

    @pl.when(k == pl.num_programs(2) - 1)
    def _():
        # Single cross-lane reduce + relayout + output store per output tile.
        o_ref[...] = jnp.sum(acc_ref[...], axis=-1)[:, None, :]


# ------------------------------------ wrapper ------------------------------------

def _divisors_desc(v):
    return [t for t in range(v, 0, -1) if v % t == 0]


def _vmem_physical_bytes():
    # Per-TensorCore VMEM: 128 MiB on v5e/v6e, 64 MiB on v7x.
    try:
        return int(pltpu.get_tpu_info().vmem_capacity_bytes)
    except Exception:
        return 64 << 20


def multi_spectral_dct_forward(x, weight):
    """x: (N, C, H, W, D), weight: (C, H, W, D) -> (N, C)."""
    n, c, h, w, d = x.shape
    assert weight.shape == (c, h, w, d), (weight.shape, x.shape)
    s = h * w * d

    x2 = x.reshape(n, c, s)
    w2 = weight.reshape(c, s)
    isize = x2.dtype.itemsize
    wsize = w2.dtype.itemsize
    w_bytes = c * s * wsize

    vmem_phys = _vmem_physical_bytes()
    pipeline_budget = min(max(vmem_phys // 4, 8 << 20), 24 << 20)   # for pipelined x blocks
    weight_budget = min(max(vmem_phys // 8, 4 << 20), 12 << 20)     # for the resident weight

    # Channel-tile candidates obeying the (8,128) rule on the last two block dims:
    # either the full C extent, or a multiple of 128 that divides C.
    c_tiles = [c]
    if c % 128 == 0:
        c_tiles += [t for t in range(128, c, 128) if c % t == 0]
    ct_min = min(c_tiles)

    def a_fit(bn_, ct_):
        blk = bn_ * ct_ * s
        # double-buffered x block + in-kernel f32 product temp
        return 2 * blk * isize + 4 * blk <= pipeline_budget

    use_full_s = (2 * w_bytes <= weight_budget) and a_fit(1, ct_min)

    if use_full_s:
        # ---------------- common path: weight resident, full S per step ----------------
        fitting = [t for t in c_tiles if a_fit(1, t)]
        if n >= 2:
            c_tile = max(fitting)
        else:
            # Batch alone can't feed both v7x TensorCores; prefer >= 2 channel tiles.
            sub = [t for t in fitting if t < c]
            c_tile = max(sub) if sub else max(fitting)
        nc = c // c_tile

        bn = 1
        max_steps = n * nc
        for cand in _divisors_desc(n):
            steps = (n // cand) * nc
            if not a_fit(cand, c_tile):
                continue
            if max_steps >= 2 and steps < 2:
                continue   # keep >= 2 parallel grid steps for the 2 v7x TensorCores
            bn = cand
            break
        nb = n // bn

        w3 = w2.reshape(nc, c_tile, s)   # contiguous channel slabs, matches x channel tiling
        kernel = _dct_pool_full_s_kernel
        grid = (nb, nc)
        in_specs = [
            # x: one (bn, c_tile, S) block streamed per grid step (full S -> no padding)
            pl.BlockSpec((bn, c_tile, s), lambda i, j: (i, j, 0)),
            # weight: single full-extent block, constant index map -> DMA'd once, VMEM-resident
            pl.BlockSpec((nc, c_tile, s), lambda i, j: (0, 0, 0)),
        ]
        out_specs = pl.BlockSpec((bn, 1, c_tile), lambda i, j: (i, 0, j))
        scratch = ()
        dim_sem = ("parallel", "parallel")
        args = (x2, w3)
        vmem_need = (2 * bn * c_tile * s * isize     # double-buffered x blocks
                     + 4 * bn * c_tile * s           # f32 product temp
                     + 2 * w_bytes                   # resident weight (counted conservatively)
                     + 4 * bn * c_tile * 4)          # output blocks
    else:
        # ---------------- fallback: very large S -> tiled reduction along S ----------------
        c_tile = 128 if (c % 128 == 0 and c > 128) else c
        nc = c // c_tile

        def b_fit(bn_, ts_):
            blk = bn_ * c_tile * ts_
            return (2 * blk * isize + 4 * blk + 2 * c_tile * ts_ * wsize) <= pipeline_budget

        ts = min(2048, -(-s // 128) * 128)
        while ts > 128 and not b_fit(1, ts):
            ts //= 2
        ts = max(ts, 128)
        ns = -(-s // ts)

        bn = 1
        for cand in _divisors_desc(n):
            if b_fit(cand, ts):
                bn = cand   # largest batch block -> weight re-fetched only N/bn times
                break
        nb = n // bn

        kernel = functools.partial(_dct_pool_tiled_kernel, s, ts)
        grid = (nb, nc, ns)
        in_specs = [
            pl.BlockSpec((bn, c_tile, ts), lambda i, j, k: (i, j, k)),
            pl.BlockSpec((c_tile, ts), lambda i, j, k: (j, k)),
        ]
        out_specs = pl.BlockSpec((bn, 1, c_tile), lambda i, j, k: (i, 0, j))
        scratch = (pltpu.VMEM((bn, c_tile, 128), jnp.float32),)
        dim_sem = ("parallel", "parallel", "arbitrary")
        args = (x2, w2)
        vmem_need = (2 * bn * c_tile * ts * isize + 4 * bn * c_tile * ts
                     + 2 * c_tile * ts * wsize
                     + bn * c_tile * 128 * 4 + 4 * bn * c_tile * 4)

    # Explicit scoped-VMEM limit sized to the actual blocks (v5e default is only 16 MiB;
    # keep well under v7x's 64 MiB physical VMEM).
    vmem_limit = int(min(max(vmem_need + (4 << 20), 32 << 20), (vmem_phys * 3) // 4))

    out = pl.pallas_call(
        kernel,
        out_shape=jax.ShapeDtypeStruct((n, 1, c), jnp.float32),
        grid=grid,
        in_specs=in_specs,
        out_specs=out_specs,
        scratch_shapes=list(scratch),
        compiler_params=pltpu.CompilerParams(
            dimension_semantics=dim_sem,
            vmem_limit_bytes=vmem_limit),
    )(*args)

    return out.reshape(n, c).astype(x.dtype)


# ------------------------------------ pure-JAX reference ------------------------------------

def _ref_forward(x, weight):
    return jnp.sum(x.astype(jnp.float32) * weight.astype(jnp.float32)[None], axis=(2, 3, 4))


if __name__ == "__main__":
    key = jax.random.PRNGKey(0)
    k1, k2 = jax.random.split(key)
    mx, my, mz = [0, 1, 2, 3], [0, 2, 1, 3], [0, 1, 3, 2]

    # Case 1: batch >= 2, canonical FcaNet-style 7x7x7 DCT tile (S = 343, NOT a
    # multiple of 128 -> exercises the no-padding full-S path).
    n1, c1, t1 = 2, 16, 7
    w1 = get_dct_filter(t1, t1, t1, mx, my, mz, c1)
    x1 = jax.random.normal(k1, (n1, c1, t1, t1, t1), jnp.float32)
    out1 = jax.block_until_ready(jax.jit(multi_spectral_dct_forward)(x1, w1))
    ref1 = jax.block_until_ready(_ref_forward(x1, w1))
    assert out1.shape == (n1, c1), out1.shape
    if not jnp.allclose(out1, ref1, rtol=1e-3, atol=1e-3):
        raise AssertionError("case 1: Pallas MultiSpectralDCTLayer mismatch vs JAX reference")

    # Case 2: batch == 1, C a multiple of 128 -> channel-tiled parallel axis
    # (keeps both v7x TensorCores busy) with dynamic channel-slab indexing of
    # the VMEM-resident weight.
    n2, c2, t2 = 1, 256, 4
    w2_ = get_dct_filter(t2, t2, t2, mx, my, mz, c2)
    x2_ = jax.random.normal(k2, (n2, c2, t2, t2, t2), jnp.float32)
    out2 = jax.block_until_ready(jax.jit(multi_spectral_dct_forward)(x2_, w2_))
    ref2 = jax.block_until_ready(_ref_forward(x2_, w2_))
    assert out2.shape == (n2, c2), out2.shape
    if not jnp.allclose(out2, ref2, rtol=1e-3, atol=1e-3):
        raise AssertionError("case 2: Pallas MultiSpectralDCTLayer mismatch vs JAX reference")

    print("KERNEL_OK")
</pallas_src>

<mosaic_0001>
module attributes {stable_mosaic.version = 11 : i64} {
  func.func @_dct_pool_full_s_kernel(%arg0: i32, %arg1: i32, %arg2: memref<1x16x343xf32, #tpu.memory_space<vmem>>, %arg3: memref<1x16x343xf32, #tpu.memory_space<vmem>>, %arg4: memref<1x1x16xf32, #tpu.memory_space<vmem>>) attributes {dimension_semantics = [#tpu.dimension_semantics<parallel>, #tpu.dimension_semantics<parallel>], iteration_bounds = array<i64: 2, 1>, scalar_prefetch = 0 : i64, scratch_operands = 0 : i64, tpu.core_type = #tpu.core_type<tc>, window_params = [{transform_indices = @transform_0, window_bounds = array<i64: 1, 16, 343>}, {pipeline_mode = #tpu.pipeline_mode<synchronous>, transform_indices = @transform_1, window_bounds = array<i64: 1, 16, 343>}, {transform_indices = @transform_2, window_bounds = array<i64: 1, 1, 16>}]} {
    %0 = arith.index_cast %arg1 : i32 to index
    %c0 = arith.constant 0 : index
    %c0_0 = arith.constant 0 : index
    %1 = vector.load %arg3[%0, %c0, %c0_0] : memref<1x16x343xf32, #tpu.memory_space<vmem>>, vector<1x16x343xf32>
    %2 = vector.shape_cast %1 : vector<1x16x343xf32> to vector<16x343xf32>
    %c0_1 = arith.constant 0 : index
    %c0_2 = arith.constant 0 : index
    %c0_3 = arith.constant 0 : index
    %3 = vector.load %arg2[%c0_1, %c0_2, %c0_3] : memref<1x16x343xf32, #tpu.memory_space<vmem>>, vector<1x16x343xf32>
    %4 = vector.shape_cast %2 : vector<16x343xf32> to vector<1x16x343xf32>
    %5 = arith.mulf %3, %4 : vector<1x16x343xf32>
    %cst = arith.constant dense<0.000000e+00> : vector<1x16xf32>
    %6 = vector.multi_reduction <add>, %5, %cst [2] : vector<1x16x343xf32> to vector<1x16xf32>
    %7 = vector.shape_cast %6 : vector<1x16xf32> to vector<1x1x16xf32>
    %c0_4 = arith.constant 0 : index
    %c0_5 = arith.constant 0 : index
    %c0_6 = arith.constant 0 : index
    %8 = vector.load %arg4[%c0_4, %c0_5, %c0_6] : memref<1x1x16xf32, #tpu.memory_space<vmem>>, vector<1x1x16xf32>
    tpu.vector_store %arg4[%c0_4, %c0_5, %c0_6], %7 {strides = array<i32>} : memref<1x1x16xf32, #tpu.memory_space<vmem>>, vector<1x1x16xf32>,
    return
  }
  func.func @transform_0(%arg0: i32, %arg1: i32) -> (i32, i32, i32) {
    %c0_i32 = arith.constant 0 : i32
    %c0_i32_0 = arith.constant 0 : i32
    return %arg0, %arg1, %c0_i32 : i32, i32, i32
  }
  func.func @transform_1(%arg0: i32, %arg1: i32) -> (i32, i32, i32) {
    %c0_i32 = arith.constant 0 : i32
    %c0_i32_0 = arith.constant 0 : i32
    %c0_i32_1 = arith.constant 0 : i32
    %c0_i32_2 = arith.constant 0 : i32
    return %c0_i32, %c0_i32_0, %c0_i32_1 : i32, i32, i32
  }
  func.func @transform_2(%arg0: i32, %arg1: i32) -> (i32, i32, i32) {
    %c0_i32 = arith.constant 0 : i32
    %c0_i32_0 = arith.constant 0 : i32
    return %arg0, %c0_i32, %arg1 : i32, i32, i32
  }
}

</mosaic_0001>

<llo_original>
// kernel: multi_spectral_dct_forward.1
$region0: #{multi_spectral_dct_forward.1}
  #allocation0 [shape = 'u32[]', space=smem, size = 0x4, offset = 0x4, fixed_abs, tag = 'smem constant byte address 0x4 - core index']
  #allocation1 [shape = 'u32[144,128]{1,0:T(1,128)}', space=vmem, size = 0x12000, scoped, tag = 'internal scratch']
  %s0 = inlined_call_operand.vmem [shape: f32[2,16,343], index: 0, kind: input, shape index: {}]
  %s1 = inlined_call_operand.vmem [shape: f32[1,16,343], index: 1, kind: input, shape index: {}]
  %s2 = inlined_call_operand.hbm [shape: f32[2,1,16], index: 2, kind: output, shape index: {}]
  %s3 = sld [smem:[#allocation0]]
  $region41: #{multi_spectral_dct_forward.1} parent=0
    _
  %s5 = ssub.s32 1, %s3
  %s6 = scalar_select 0, %s5, %s3
  $region1: #{multi_spectral_dct_forward.1} parent=0
    #allocation2 [shape = 'u8[1024]{0}', space=vmem, size = 0x400, scoped, tag = 'output window, operand 0']
    #allocation3 [shape = 's32[2]{0}', space=sflag, size = 0x8, scoped, tag = 'scoped memory for multi_spectral_dct_forward.1']
    %7 = vsyncpa [#allocation3], 0
    %s8 = scalar_lea.sflag [#allocation3], 1
    %9 = vsyncpa %s8, 0
    loop: start=0, step=1, limit=4
    $region2: #{multi_spectral_dct_forward.1} parent=1 // loop_pre_header
      _
    $region3: #{multi_spectral_dct_forward.1} parent=1 // loop_header
      %s11 = sphi 0, %s15
      %p12 = scmp.ge.s32.totalorder %s11, 4
      %s18 = sphi 0, %s30
      %s19 = sphi 0, %s26
      %s20 = sphi 0, %s18
      %s21 = sphi 0, %s19
      %s22 = sphi 0, %s20
      %s23 = sphi 0, %s21
      %s35 = sphi 0, %s37
      %s38 = sphi 0, %s35
      %s39 = sphi 0, %s38
      %s55 = sphi 0, %s39
      %s59 = sphi 0, %s59
      %s61 = sphi 0, %s59
      %s62 = sphi 0, %s61
      %s76 = sphi 0, %s62
      %s84 = sphi 0, %s86
      %s87 = sphi 0, %s84
      %s88 = sphi 0, %s87
      %s104 = sphi 0, %s88
    $region4: #{multi_spectral_dct_forward.1} parent=1 // loop_header_branch
      %14 = sbr.rel (%p12) target = $region8
    $region5: #{multi_spectral_dct_forward.1} parent=1 // loop_body
      %s16 = ssub.s32 %s11, 1
      %s17 = ssub.s32 %s11, 2
      %s24 = sadd.s32 1, %s19
      %p25 = scmp.ge.s32.totalorder %s24, 1
      %s26 = scalar_select %p25, 0, %s24
      %s27 = sadd.s32 1, %s18
      %s28 = scalar_select %p25, %s27, %s18
      %p29 = scmp.ge.s32.totalorder %s28, 2
      %s30 = scalar_select %p29, 0, %s28
      %s31 = ssub.s32 %s18, %s30
      %s32 = ssub.s32 %s19, %s26
      %s33 = sor.u32 %s31, %s32
      %p34 = scmp.eq.s32.totalorder %s33, 0
      %s36 = sadd.s32 %s35, 1
      %s37 = scalar_select %p34, %s35, %s36
      %p40 = pneg %p34
      %p41 = scmp.eq.s32.totalorder %s11, 1
      %p42 = por %p40, %p41
      %p43 = scmp.ne.s32.totalorder %s35, %s38
      %p44 = scmp.eq.s32.totalorder %s11, 0
      %p45 = por %p43, %p44
      %p46 = scmp.ne.s32.totalorder %s35, %s38
      %p47 = scmp.eq.s32.totalorder %s16, 1
      %p48 = por %p46, %p47
      %p49 = scmp.ne.s32.totalorder %s38, %s39
      %p50 = scmp.eq.s32.totalorder %s16, 0
      %p51 = por %p49, %p50
      %p52 = scmp.ne.s32.totalorder %s38, %s39
      %p53 = scmp.eq.s32.totalorder %s17, 1
      %p54 = por %p52, %p53
      %p56 = scmp.ne.s32.totalorder %s39, %s55
      %p57 = scmp.eq.s32.totalorder %s17, 0
      %p58 = por %p56, %p57
      %s60 = sadd.s32 %s59, 1
      %p63 = scmp.eq.s32.totalorder %s11, 1
      %p64 = scmp.ne.s32.totalorder %s59, %s61
      %p65 = scmp.eq.s32.totalorder %s11, 0
      %p66 = por %p64, %p65
      %p67 = scmp.ne.s32.totalorder %s59, %s61
      %p68 = scmp.eq.s32.totalorder %s16, 1
      %p69 = por %p67, %p68
      %p70 = scmp.ne.s32.totalorder %s61, %s62
      %p71 = scmp.eq.s32.totalorder %s16, 0
      %p72 = por %p70, %p71
      %p73 = scmp.ne.s32.totalorder %s61, %s62
      %p74 = scmp.eq.s32.totalorder %s17, 1
      %p75 = por %p73, %p74
      %p77 = scmp.ne.s32.totalorder %s62, %s76
      %p78 = scmp.eq.s32.totalorder %s17, 0
      %p79 = por %p77, %p78
      %s80 = ssub.s32 %s18, %s30
      %s81 = ssub.s32 %s19, %s26
      %s82 = sor.u32 %s80, %s81
      %p83 = scmp.eq.s32.totalorder %s82, 0
      %s85 = sadd.s32 %s84, 1
      %s86 = scalar_select %p83, %s84, %s85
      %p89 = pneg %p83
      %p90 = scmp.eq.s32.totalorder %s11, 1
      %p91 = por %p89, %p90
      %p92 = scmp.ne.s32.totalorder %s84, %s87
      %p93 = scmp.eq.s32.totalorder %s11, 0
      %p94 = por %p92, %p93
      %p95 = scmp.ne.s32.totalorder %s84, %s87
      %p96 = scmp.eq.s32.totalorder %s16, 1
      %p97 = por %p95, %p96
      %p98 = scmp.ne.s32.totalorder %s87, %s88
      %p99 = scmp.eq.s32.totalorder %s16, 0
      %p100 = por %p98, %p99
      %p101 = scmp.ne.s32.totalorder %s87, %s88
      %p102 = scmp.eq.s32.totalorder %s17, 1
      %p103 = por %p101, %p102
      %p105 = scmp.ne.s32.totalorder %s88, %s104
      %p106 = scmp.eq.s32.totalorder %s17, 0
      %p107 = por %p105, %p106
      %p108 = scmp.le.s32.totalorder 1, %s11
      %p109 = scmp.lt.s32.totalorder %s11, 3
      %p110 = pnand %p108, %p109
      %p111 = pneg %p110
      // Predicated region
      $region9: #{multi_spectral_dct_forward.1} parent=5 // pred_check
        _
      $region10: #{multi_spectral_dct_forward.1} parent=5 // pred_check_branch
        %113 = sbr.rel (%p110) target = $region12
      $region11: #{multi_spectral_dct_forward.1} parent=5 // pred_region
        %s114 = ssub.s32 %s11, 1
        // Predicated region
        $region13: #{multi_spectral_dct_forward.1} parent=11 // pred_check
          %p115 = pneg %p72
        $region14: #{multi_spectral_dct_forward.1} parent=11 // pred_check_branch
          %117 = sbr.rel (%p115) target = $region16
        $region15: #{multi_spectral_dct_forward.1} parent=11 // pred_region
          _
        $region16: #{multi_spectral_dct_forward.1} parent=11 // pred_fallthru
          _
      $region12: #{multi_spectral_dct_forward.1} parent=5 // pred_fallthru
        _
      %p118 = scmp.lt.s32.totalorder %s11, 2
      // Predicated region
      $region17: #{multi_spectral_dct_forward.1} parent=5 // pred_check
        %p119 = pneg %p118
      $region18: #{multi_spectral_dct_forward.1} parent=5 // pred_check_branch
        %121 = sbr.rel (%p119) target = $region20
      $region19: #{multi_spectral_dct_forward.1} parent=5 // pred_region
        // Predicated region
        $region21: #{multi_spectral_dct_forward.1} parent=19 // pred_check
          %p122 = pneg %p45
        $region22: #{multi_spectral_dct_forward.1} parent=19 // pred_check_branch
          %124 = sbr.rel (%p122) target = $region24
        $region23: #{multi_spectral_dct_forward.1} parent=19 // pred_region
          %s125 = smul.u32 2, %s19
          %p126 = scmp.lt.s32.totalorder %s18, 1
          %s127 = scalar_select %p126, %s18, 1
          %p128 = scmp.lt.s32.totalorder %s125, 1
          %s129 = scalar_select %p128, %s125, 1
          %s130 = smul.addr %s129, 3
          %s131 = smul.addr %s127, 6
          %s132 = sadd.s32 %s130, %s131
          %s133 = smul.addr %s132, 8
          %s134 = scalar_lea.vmem %s0, %s133
          %s135 = smul.u32 2, %s19
        $region24: #{multi_spectral_dct_forward.1} parent=19 // pred_fallthru
          _
      $region20: #{multi_spectral_dct_forward.1} parent=5 // pred_fallthru
        _
      %p136 = scmp.le.s32.totalorder 1, %s11
      %p137 = scmp.lt.s32.totalorder %s11, 3
      %p138 = pnand %p136, %p137
      %p139 = pneg %p138
      // Predicated region
      $region25: #{multi_spectral_dct_forward.1} parent=5 // pred_check
        _
      $region26: #{multi_spectral_dct_forward.1} parent=5 // pred_check_branch
        %141 = sbr.rel (%p138) target = $region28
      $region27: #{multi_spectral_dct_forward.1} parent=5 // pred_region
        %s142 = ssub.s32 %s11, 1
        %s143 = smul.u32 2, %s21
        %p144 = scmp.lt.s32.totalorder %s20, 1
        %s145 = scalar_select %p144, %s20, 1
        %p146 = scmp.lt.s32.totalorder %s143, 1
        %s147 = scalar_select %p146, %s143, 1
        %s148 = smul.addr %s147, 3
        %s149 = smul.addr %s145, 6
        %s150 = sadd.s32 %s148, %s149
        %s151 = smul.addr %s150, 8
        %s152 = scalar_lea.vmem %s0, %s151
        %p153 = pneg %p51
        %p154 = pneg %p48
        %p155 = pneg %p72
        %p156 = pneg %p69
        %p157 = pneg %p100
        %p158 = pneg %p97
        %s159 = sand.u32 %s87, 1
        %s160 = scalar_lea.sflag [#allocation3], %s159
        %s161 = sand.u32 %s87, 1
        %s162 = scalar_lea.vmem [#allocation2], %s161
        %s163 = smul.u32 2, %s21
        %p164 = scmp.lt.s32.totalorder %s20, 1
        %s165 = scalar_select %p164, %s20, 1
        %p166 = scmp.lt.s32.totalorder %s163, 1
        %s167 = scalar_select %p166, %s163, 1
        %s168 = smul.addr %s167, 3
        %s169 = smul.addr %s165, 6
        %s170 = sadd.s32 %s168, %s169
        %s171 = smul.addr %s170, 8
        %s172 = scalar_lea.vmem %s0, %s171
        %s173 = smul.u32 2, %s21
        %s174 = smul.u32 %s21, 6
        %s175 = smul.addr %s174, 8
        %s176 = scalar_lea.vmem %s1, %s175
        %v177 = vld [vmem:[%s176] sm:$0xff]
        %v178 = vld [vmem:[%s176 + $0x8] sm:$0xff]
        %v179 = vld [vmem:[%s176 + $0x10] sm:$0xff]
        %v180 = vld [vmem:[%s176 + $0x18] sm:$0xff]
        %v181 = vld [vmem:[%s176 + $0x20] sm:$0xff]
        %v182 = vld [vmem:[%s176 + $0x28] sm:$0xff]
        %v183 = vld [vmem:[%s172] sm:$0xff]
        %v184 = vld [vmem:[%s172 + $0x8] sm:$0xff]
        %v185 = vld [vmem:[%s172 + $0x10] sm:$0xff]
        %v186 = vld [vmem:[%s172 + $0x18] sm:$0xff]
        %v187 = vld [vmem:[%s172 + $0x20] sm:$0xff]
        %v188 = vld [vmem:[%s172 + $0x28] sm:$0xff]
        %v189 = vmul.f32 %v183, %v177
        %v190 = vmul.f32 %v184, %v178
        %v191 = vmul.f32 %v185, %v179
        %v192 = vmul.f32 %v186, %v180
        %v193 = vmul.f32 %v187, %v181
        %v194 = vmul.f32 %v188, %v182
        %v195 = vadd.f32 %v189, %v190
        %vm196 = vcmask 711680
        %v197 = vsel %vm196, %v191, 0.0
        %v198 = vadd.f32 %v195, %v197
        %199 = vadd.xlane.f32.xlu0 %v198
        %v200 = vpop.xlane.xlu0 %199
        %v201 = vadd.f32 %v192, %v193
        %v202 = vsel %vm196, %v194, 0.0
        %v203 = vadd.f32 %v201, %v202
        %204 = vadd.xlane.f32.xlu0 %v203
        %v205 = vpop.xlane.xlu0 %204
        %v208 = vlaneseq
        %v209 = vand.u32 %v208, 127
        %v210 = vlaneseq
        %v211 = vshrl.u32 %v210, 7
        %v212 = vsub.s32 %v209, %v211
        %v213 = vrot.slane %v200, %v212
        %v214 = vadd.s32 %v209, 4294967288
        %v215 = vlaneseq
        %v216 = vshrl.u32 %v215, 7
        %v217 = vsub.s32 %v214, %v216
        %v218 = vrot.slane %v205, %v217
        %vm219 = vcmask 130112
        %v220 = vsel %vm219, %v218, %v213
        %vm222 = vcmask 122880
        %223 = vst.msk [vmem:[%s162] sm:$0x1] %vm222, %v220
        %s224 = sand.u32 %s87, 1
        %s225 = scalar_lea.sflag [#allocation3], %s224
        %s226 = sand.u32 %s87, 1
        %s227 = scalar_lea.vmem [#allocation2], %s226
        // Predicated region
        $region29: #{multi_spectral_dct_forward.1} parent=27 // pred_check
          %p228 = pneg %p97
        $region30: #{multi_spectral_dct_forward.1} parent=27 // pred_check_branch
          %230 = sbr.rel (%p228) target = $region32
        $region31: #{multi_spectral_dct_forward.1} parent=27 // pred_region
          %s232 = ssub.s32 16, 16
          %233 = vsyncadd %s225, %s232
          %s234 = sadd.s32 %s21, %s20
          %s235 = smul.addr %s234, 16
          %s236 = scalar_lea.hbm %s2, %s235
          %s238 = sshll.u32 %s227, 4
          %s239 = int_to_ptr.vmem [resolvable:$true] %s238
          %241 = dma.vmem_to_hbm [thread:$0]  %s239, 16, %s236, %s225
        $region32: #{multi_spectral_dct_forward.1} parent=27 // pred_fallthru
          _
      $region28: #{multi_spectral_dct_forward.1} parent=5 // pred_fallthru
        _
      %p242 = scmp.le.s32.totalorder 2, %s11
      // Predicated region
      $region33: #{multi_spectral_dct_forward.1} parent=5 // pred_check
        %p243 = pneg %p242
      $region34: #{multi_spectral_dct_forward.1} parent=5 // pred_check_branch
        %245 = sbr.rel (%p243) target = $region36
      $region35: #{multi_spectral_dct_forward.1} parent=5 // pred_region
        %s246 = ssub.s32 %s11, 2
        // Predicated region
        $region37: #{multi_spectral_dct_forward.1} parent=35 // pred_check
          %p247 = pneg %p103
        $region38: #{multi_spectral_dct_forward.1} parent=35 // pred_check_branch
          %249 = sbr.rel (%p247) target = $region40
        $region39: #{multi_spectral_dct_forward.1} parent=35 // pred_region
          %s250 = sand.u32 %s88, 1
          %s251 = scalar_lea.sflag [#allocation3], %s250
          %s252 = sand.u32 %s88, 1
          %s253 = scalar_lea.vmem [#allocation2], %s252
          %254 = dma.done %s251, 16
        $region40: #{multi_spectral_dct_forward.1} parent=35 // pred_fallthru
          _
      $region36: #{multi_spectral_dct_forward.1} parent=5 // pred_fallthru
        _
    $region6: #{multi_spectral_dct_forward.1} parent=1 // loop_footer
      %s15 = sadd.s32 1, %s11
    $region7: #{multi_spectral_dct_forward.1} parent=1 // loop_footer_branch
      %10 = sbr.rel target = $region3
    $region8: #{multi_spectral_dct_forward.1} parent=1 // loop_exit
      _
    %255 = vsyncpa [#allocation3], 1
    %s256 = scalar_lea.sflag [#allocation3], 1
    %257 = vsyncpa %s256, 1

</llo_original>
